<compile_context>
chip_gen: v7x
topology: tpu7x:2x2x1
jax: 0.10.0
libtpu: 0.0.40
codegen_flags: <defaults>
</compile_context>

<pallas_src>
import random

import numpy as np
import jax
import jax.numpy as jnp
from jax import lax
from jax.experimental import pallas as pl
from jax.experimental.pallas import tpu as pltpu


def _round_up(x, m):
    return ((x + m - 1) // m) * m


# ----------------------------------------------------------------------------
# Bicubic interpolation weight matrix (PIL-like: cubic a=-0.5, antialias)
# ----------------------------------------------------------------------------
def _cubic(x, a=-0.5):
    x = np.abs(x)
    return np.where(
        x < 1.0,
        (a + 2.0) * x ** 3 - (a + 3.0) * x ** 2 + 1.0,
        np.where(x < 2.0, a * (x ** 3 - 5.0 * x ** 2 + 8.0 * x - 4.0), 0.0),
    )


def bicubic_weight_matrix(in_size: int, out_size: int) -> np.ndarray:
    """Returns W of shape (out_size, in_size) s.t. out = W @ in_vec."""
    scale = in_size / out_size
    filterscale = max(scale, 1.0)          # antialias widening when downscaling
    support = 2.0 * filterscale
    W = np.zeros((out_size, in_size), dtype=np.float64)
    for i in range(out_size):
        center = (i + 0.5) * scale
        lo = max(0, int(center - support + 0.5))
        hi = min(in_size, int(center + support + 0.5))
        xs = np.arange(lo, hi, dtype=np.float64)
        w = _cubic((xs - center + 0.5) / filterscale)
        s = w.sum()
        if s != 0.0:
            w = w / s
        W[i, lo:hi] = w
    return W.astype(np.float32)


def _crop_window_params(height, width, start_y, start_x, crop_h, crop_w, out_size):
    """Bucketed crop-window sizes + small per-call weight matrices (numpy f32).

    Returns:
      wy  : (S, Hc)     row-resize weights, nonzero over the crop rows
      wxt : (Wc, S_pad) pre-transposed column-resize weights, nonzero over the
                        crop columns; S_pad is 128-aligned (lane-dense output)
      sy, sx : window start offsets (dynamic, no recompile on change)
    """
    # Bucket the crop size to (16, 128)-aligned windows (clamped to the image)
    # so kernel block shapes stay static across most random crops.
    hc = min(_round_up(crop_h, 16), height)
    wc = min(_round_up(crop_w, 128), width)
    sy = min(start_y, height - hc)
    sx = min(start_x, width - wc)
    off_y = start_y - sy                      # crop offset inside the window
    off_x = start_x - sx

    s_pad = _round_up(out_size, 128)

    wy = np.zeros((out_size, hc), dtype=np.float32)
    wy[:, off_y:off_y + crop_h] = bicubic_weight_matrix(crop_h, out_size)

    wxt = np.zeros((wc, s_pad), dtype=np.float32)
    wxt[off_x:off_x + crop_w, :out_size] = bicubic_weight_matrix(crop_w, out_size).T
    return wy, wxt, sy, sx


# ----------------------------------------------------------------------------
# Pallas kernel: per-channel separable resize, K-tiled over the crop width
# ----------------------------------------------------------------------------
def _resize_kernel(img_ref, wy_ref, wxt_ref, out_ref, acc_ref):
    # img_ref : (1, Hc, TW)  bf16   (channel c, W-tile k of the crop window)
    # wy_ref  : (S, Hc)      bf16   (VMEM-resident across the whole grid)
    # wxt_ref : (TW, S_pad)  bf16
    # out_ref : (1, S, S_pad) f32
    # acc_ref : (S, S_pad)   f32 scratch accumulator
    k = pl.program_id(1)

    @pl.when(k == 0)
    def _():
        acc_ref[...] = jnp.zeros_like(acc_ref)

    # Row resize: (S, Hc) @ (Hc, TW) -> (S, TW), f32 accumulation on MXU.
    tmp = jnp.dot(wy_ref[...], img_ref[0], preferred_element_type=jnp.float32)
    # Column resize: (S, TW) @ (TW, S_pad) -> (S, S_pad), f32 accumulation.
    acc_ref[...] += jnp.dot(tmp.astype(jnp.bfloat16), wxt_ref[...],
                            preferred_element_type=jnp.float32)

    @pl.when(k == pl.num_programs(1) - 1)
    def _():
        out_ref[0] = acc_ref[...]


@jax.jit
def _crop_resize_call(img, wy, wxt, sy, sx):
    C, H, W = img.shape
    S, Hc = wy.shape
    Wc, S_pad = wxt.shape

    # Extract the (bucketed) crop window: dynamic offset, static size.
    zero = jnp.zeros((), dtype=jnp.int32)
    window = lax.dynamic_slice(
        img, (zero, jnp.asarray(sy, jnp.int32), jnp.asarray(sx, jnp.int32)),
        (C, Hc, Wc)).astype(jnp.bfloat16)

    # K-tile the crop width (contraction dim of the second matmul).
    if Wc > 128 and Wc % 128 == 0:
        tw = 128
    else:
        tw = Wc
    num_k = Wc // tw

    out = pl.pallas_call(
        _resize_kernel,
        out_shape=jax.ShapeDtypeStruct((C, S, S_pad), jnp.float32),
        grid_spec=pltpu.PrefetchScalarGridSpec(
            num_scalar_prefetch=0,
            grid=(C, num_k),
            in_specs=[
                pl.BlockSpec((1, Hc, tw), lambda c, k: (c, 0, k)),
                pl.BlockSpec((S, Hc), lambda c, k: (0, 0)),
                pl.BlockSpec((tw, S_pad), lambda c, k: (k, 0)),
            ],
            out_specs=pl.BlockSpec((1, S, S_pad), lambda c, k: (c, 0, 0)),
            scratch_shapes=[pltpu.VMEM((S, S_pad), jnp.float32)],
        ),
        compiler_params=pltpu.CompilerParams(
            dimension_semantics=("parallel", "arbitrary"),
            vmem_limit_bytes=32 * 1024 * 1024,
        ),
    )(window, wy, wxt)

    # Lane padding off (pure layout epilogue); kernel already wrote (C, S, S_pad).
    return out[:, :, :S]


# ----------------------------------------------------------------------------
# Inception module forward (crop params drawn exactly like the PyTorch module)
# ----------------------------------------------------------------------------
class Inception:
    def __init__(self, window_size: int):
        self.window_size = window_size

    def __call__(self, img: jax.Array) -> jax.Array:
        C = int(img.shape[0])
        height, width = int(img.shape[1]), int(img.shape[2])
        whole_size = height * width
        random_ratio = random.uniform(0.08, 1.0)
        target_pixel = int(whole_size * random_ratio)
        height_width_ratio = random.uniform(3 / 4, 4 / 3)
        target_height = int((target_pixel / height_width_ratio) ** 0.5)
        target_width = int(target_height * height_width_ratio)
        if target_height > height:
            target_height = height
        if target_width > width:
            target_width = width
        target_height = max(target_height, 1)   # safety guard for degenerate tiny images
        target_width = max(target_width, 1)
        start_x = random.randint(0, width - target_width)
        start_y = random.randint(0, height - target_height)

        wy, wxt, sy, sx = _crop_window_params(
            height, width, start_y, start_x,
            target_height, target_width, self.window_size)

        return _crop_resize_call(
            img.astype(jnp.float32),
            jnp.asarray(wy, dtype=jnp.bfloat16),
            jnp.asarray(wxt, dtype=jnp.bfloat16),
            sy, sx)


if __name__ == "__main__":
    random.seed(0)
    key = jax.random.PRNGKey(0)
    C, H, W = 3, 16, 16
    window_size = 8
    img = jax.random.normal(key, (C, H, W), dtype=jnp.float32)

    # --- deterministic correctness check against a pure-JAX f32 reference ----
    crop_h, crop_w, start_y, start_x = 10, 12, 3, 2
    wy_np, wxt_np, sy, sx = _crop_window_params(
        H, W, start_y, start_x, crop_h, crop_w, window_size)
    out_k = jax.block_until_ready(
        _crop_resize_call(img, jnp.asarray(wy_np, jnp.bfloat16),
                          jnp.asarray(wxt_np, jnp.bfloat16), sy, sx))
    window = lax.dynamic_slice(img, (0, sy, sx), (C, wy_np.shape[0] and wy_np.shape[1], wxt_np.shape[0]))
    ref = jnp.einsum('sh,chw,wt->cst',
                     jnp.asarray(wy_np), window, jnp.asarray(wxt_np))[:, :, :window_size]
    assert out_k.shape == (C, window_size, window_size), out_k.shape
    assert bool(jnp.allclose(out_k, ref, rtol=2e-2, atol=3e-2)), \
        float(jnp.max(jnp.abs(out_k - ref)))

    # --- Inception forward: random crop params like the PyTorch module -------
    model = Inception(window_size)
    out = jax.block_until_ready(model(img))
    assert out.shape == (C, window_size, window_size), out.shape
    assert out.dtype == jnp.float32
    assert bool(jnp.all(jnp.isfinite(out)))

    # Second call with different random crop: bucketed window sizes keep the
    # Pallas/jit cache shapes stable, so this typically reuses the compile.
    out2 = jax.block_until_ready(model(img))
    assert out2.shape == (C, window_size, window_size)

    print("KERNEL_OK")
</pallas_src>

<mosaic_0001>
module attributes {stable_mosaic.version = 11 : i64} {
  func.func @_resize_kernel(%arg0: i32, %arg1: i32, %arg2: memref<1x16x16xbf16, #tpu.memory_space<vmem>>, %arg3: memref<8x16xbf16, #tpu.memory_space<vmem>>, %arg4: memref<16x128xbf16, #tpu.memory_space<vmem>>, %arg5: memref<1x8x128xf32, #tpu.memory_space<vmem>>, %arg6: memref<8x128xf32, #tpu.memory_space<vmem>>) attributes {dimension_semantics = [#tpu.dimension_semantics<parallel>, #tpu.dimension_semantics<arbitrary>], iteration_bounds = array<i64: 3, 1>, scalar_prefetch = 0 : i64, scratch_operands = 1 : i64, tpu.core_type = #tpu.core_type<tc>, window_params = [{transform_indices = @transform_0, window_bounds = array<i64: 1, 16, 16>}, {pipeline_mode = #tpu.pipeline_mode<synchronous>, transform_indices = @transform_1, window_bounds = array<i64: 8, 16>}, {transform_indices = @transform_2, window_bounds = array<i64: 16, 128>}, {transform_indices = @transform_3, window_bounds = array<i64: 1, 8, 128>}]} {
    %c0_i32 = arith.constant 0 : i32
    %0 = arith.cmpi eq, %arg1, %c0_i32 : i32
    %1 = arith.extui %0 : i1 to i32
    %c0_i32_0 = arith.constant 0 : i32
    %2 = arith.cmpi ne, %1, %c0_i32_0 : i32
    scf.if %2 {
      %cst_14 = arith.constant 0.000000e+00 : f32
      %16 = vector.broadcast %cst_14 : f32 to vector<8x128xf32>
      %c0_15 = arith.constant 0 : index
      %c0_16 = arith.constant 0 : index
      %17 = vector.load %arg6[%c0_15, %c0_16] : memref<8x128xf32, #tpu.memory_space<vmem>>, vector<8x128xf32>
      tpu.vector_store %arg6[%c0_15, %c0_16], %16 {strides = array<i32>} : memref<8x128xf32, #tpu.memory_space<vmem>>, vector<8x128xf32>,
    } else {
    }
    %c0 = arith.constant 0 : index
    %c0_1 = arith.constant 0 : index
    %3 = vector.load %arg3[%c0, %c0_1] : memref<8x16xbf16, #tpu.memory_space<vmem>>, vector<8x16xbf16>
    %c0_2 = arith.constant 0 : index
    %c0_3 = arith.constant 0 : index
    %c0_4 = arith.constant 0 : index
    %4 = vector.load %arg2[%c0_2, %c0_3, %c0_4] : memref<1x16x16xbf16, #tpu.memory_space<vmem>>, vector<1x16x16xbf16>
    %5 = vector.shape_cast %4 : vector<1x16x16xbf16> to vector<16x16xbf16>
    %cst = arith.constant dense<0.000000e+00> : vector<8x16xf32>
    %6 = tpu.matmul %3, %5, %cst {dimension_numbers = #tpu.dot_dimension_numbers<[1], [0], [0], [1], [0, 0, 1, 1], [], []>} : vector<8x16xbf16>, vector<16x16xbf16>, vector<8x16xf32> -> vector<8x16xf32>
    %c0_5 = arith.constant 0 : index
    %c0_6 = arith.constant 0 : index
    %7 = vector.load %arg6[%c0_5, %c0_6] : memref<8x128xf32, #tpu.memory_space<vmem>>, vector<8x128xf32>
    %8 = arith.truncf %6 : vector<8x16xf32> to vector<8x16xbf16>
    %c0_7 = arith.constant 0 : index
    %c0_8 = arith.constant 0 : index
    %9 = vector.load %arg4[%c0_7, %c0_8] : memref<16x128xbf16, #tpu.memory_space<vmem>>, vector<16x128xbf16>
    %cst_9 = arith.constant dense<0.000000e+00> : vector<8x128xf32>
    %10 = tpu.matmul %8, %9, %cst_9 {dimension_numbers = #tpu.dot_dimension_numbers<[1], [0], [0], [1], [0, 0, 1, 1], [], []>} : vector<8x16xbf16>, vector<16x128xbf16>, vector<8x128xf32> -> vector<8x128xf32>
    %11 = arith.addf %7, %10 : vector<8x128xf32>
    %c0_10 = arith.constant 0 : index
    %c0_11 = arith.constant 0 : index
    %12 = vector.load %arg6[%c0_10, %c0_11] : memref<8x128xf32, #tpu.memory_space<vmem>>, vector<8x128xf32>
    tpu.vector_store %arg6[%c0_10, %c0_11], %11 {strides = array<i32>} : memref<8x128xf32, #tpu.memory_space<vmem>>, vector<8x128xf32>,
    %c0_i32_12 = arith.constant 0 : i32
    %13 = arith.cmpi eq, %arg1, %c0_i32_12 : i32
    %14 = arith.extui %13 : i1 to i32
    %c0_i32_13 = arith.constant 0 : i32
    %15 = arith.cmpi ne, %14, %c0_i32_13 : i32
    scf.if %15 {
      %c0_14 = arith.constant 0 : index
      %c0_15 = arith.constant 0 : index
      %16 = vector.load %arg6[%c0_14, %c0_15] : memref<8x128xf32, #tpu.memory_space<vmem>>, vector<8x128xf32>
      %c0_16 = arith.constant 0 : index
      %c0_17 = arith.constant 0 : index
      %c0_18 = arith.constant 0 : index
      %17 = vector.load %arg5[%c0_16, %c0_17, %c0_18] : memref<1x8x128xf32, #tpu.memory_space<vmem>>, vector<1x8x128xf32>
      %18 = vector.shape_cast %17 : vector<1x8x128xf32> to vector<8x128xf32>
      %19 = vector.shape_cast %16 : vector<8x128xf32> to vector<1x8x128xf32>
      tpu.vector_store %arg5[%c0_16, %c0_17, %c0_18], %19 {strides = array<i32>} : memref<1x8x128xf32, #tpu.memory_space<vmem>>, vector<1x8x128xf32>,
    } else {
    }
    return
  }
  func.func @transform_0(%arg0: i32, %arg1: i32) -> (i32, i32, i32) {
    %c0_i32 = arith.constant 0 : i32
    %c0_i32_0 = arith.constant 0 : i32
    return %arg0, %c0_i32, %arg1 : i32, i32, i32
  }
  func.func @transform_1(%arg0: i32, %arg1: i32) -> (i32, i32) {
    %c0_i32 = arith.constant 0 : i32
    %c0_i32_0 = arith.constant 0 : i32
    %c0_i32_1 = arith.constant 0 : i32
    return %c0_i32, %c0_i32_0 : i32, i32
  }
  func.func @transform_2(%arg0: i32, %arg1: i32) -> (i32, i32) {
    %c0_i32 = arith.constant 0 : i32
    %c0_i32_0 = arith.constant 0 : i32
    return %arg1, %c0_i32 : i32, i32
  }
  func.func @transform_3(%arg0: i32, %arg1: i32) -> (i32, i32, i32) {
    %c0_i32 = arith.constant 0 : i32
    %c0_i32_0 = arith.constant 0 : i32
    %c0_i32_1 = arith.constant 0 : i32
    return %arg0, %c0_i32, %c0_i32_0 : i32, i32, i32
  }
}

</mosaic_0001>

<llo_original>
// kernel: _crop_resize_call.1
$region0: #{_crop_resize_call.1}
  #allocation0 [shape = 'u32[]', space=smem, size = 0x4, offset = 0x4, fixed_abs, tag = 'smem constant byte address 0x4 - core index']
  #allocation1 [shape = 'u32[144,128]{1,0:T(1,128)}', space=vmem, size = 0x12000, scoped, tag = 'internal scratch']
  #allocation2 [shape = 'f32[8,128]{1,0:T(8,128)}', space=vmem, size = 0x1000, scoped, tag = 'scratch operand']
  %s0 = inlined_call_operand.vmem [shape: bf16[3,16,16], index: 0, kind: input, shape index: {}]
  %s1 = inlined_call_operand.vmem [shape: bf16[8,16], index: 1, kind: input, shape index: {}]
  %s2 = inlined_call_operand.vmem [shape: bf16[16,128], index: 2, kind: input, shape index: {}]
  %s3 = inlined_call_operand.hbm [shape: f32[3,8,128], index: 3, kind: output, shape index: {}]
  %s4 = sld [smem:[#allocation0]]
  $region53: #{_crop_resize_call.1} parent=0
    _
  %s6 = ssub.s32 1, %s4
  %s7 = scalar_select 0, %s6, %s4
  $region1: #{_crop_resize_call.1} parent=0
    #allocation3 [shape = 'u8[8192]{0}', space=vmem, size = 0x2000, scoped, tag = 'output window, operand 0']
    #allocation4 [shape = 's32[2]{0}', space=sflag, size = 0x8, scoped, tag = 'scoped memory for _crop_resize_call.1']
    %8 = vsyncpa [#allocation4], 0
    %s9 = scalar_lea.sflag [#allocation4], 1
    %10 = vsyncpa %s9, 0
    loop: start=0, step=1, limit=5
    $region2: #{_crop_resize_call.1} parent=1 // loop_pre_header
      _
    $region3: #{_crop_resize_call.1} parent=1 // loop_header
      %s12 = sphi 0, %s16
      %p13 = scmp.ge.s32.totalorder %s12, 5
      %s19 = sphi 0, %s31
      %s20 = sphi 0, %s27
      %s21 = sphi 0, %s19
      %s22 = sphi 0, %s20
      %s23 = sphi 0, %s21
      %s24 = sphi 0, %s22
      %s36 = sphi 0, %s38
      %s39 = sphi 0, %s36
      %s40 = sphi 0, %s39
      %s56 = sphi 0, %s40
      %s60 = sphi 0, %s60
      %s62 = sphi 0, %s60
      %s63 = sphi 0, %s62
      %s77 = sphi 0, %s63
      %s83 = sphi 0, %s85
      %s86 = sphi 0, %s83
      %s87 = sphi 0, %s86
      %s103 = sphi 0, %s87
      %s109 = sphi 0, %s111
      %s112 = sphi 0, %s109
      %s113 = sphi 0, %s112
      %s129 = sphi 0, %s113
    $region4: #{_crop_resize_call.1} parent=1 // loop_header_branch
      %15 = sbr.rel (%p13) target = $region8
    $region5: #{_crop_resize_call.1} parent=1 // loop_body
      %s17 = ssub.s32 %s12, 1
      %s18 = ssub.s32 %s12, 2
      %s25 = sadd.s32 1, %s20
      %p26 = scmp.ge.s32.totalorder %s25, 1
      %s27 = scalar_select %p26, 0, %s25
      %s28 = sadd.s32 1, %s19
      %s29 = scalar_select %p26, %s28, %s19
      %p30 = scmp.ge.s32.totalorder %s29, 3
      %s31 = scalar_select %p30, 0, %s29
      %s32 = ssub.s32 %s19, %s31
      %s33 = ssub.s32 %s20, %s27
      %s34 = sor.u32 %s32, %s33
      %p35 = scmp.eq.s32.totalorder %s34, 0
      %s37 = sadd.s32 %s36, 1
      %s38 = scalar_select %p35, %s36, %s37
      %p41 = pneg %p35
      %p42 = scmp.eq.s32.totalorder %s12, 2
      %p43 = por %p41, %p42
      %p44 = scmp.ne.s32.totalorder %s36, %s39
      %p45 = scmp.eq.s32.totalorder %s12, 0
      %p46 = por %p44, %p45
      %p47 = scmp.ne.s32.totalorder %s36, %s39
      %p48 = scmp.eq.s32.totalorder %s17, 2
      %p49 = por %p47, %p48
      %p50 = scmp.ne.s32.totalorder %s39, %s40
      %p51 = scmp.eq.s32.totalorder %s17, 0
      %p52 = por %p50, %p51
      %p53 = scmp.ne.s32.totalorder %s39, %s40
      %p54 = scmp.eq.s32.totalorder %s18, 2
      %p55 = por %p53, %p54
      %p57 = scmp.ne.s32.totalorder %s40, %s56
      %p58 = scmp.eq.s32.totalorder %s18, 0
      %p59 = por %p57, %p58
      %s61 = sadd.s32 %s60, 1
      %p64 = scmp.eq.s32.totalorder %s12, 2
      %p65 = scmp.ne.s32.totalorder %s60, %s62
      %p66 = scmp.eq.s32.totalorder %s12, 0
      %p67 = por %p65, %p66
      %p68 = scmp.ne.s32.totalorder %s60, %s62
      %p69 = scmp.eq.s32.totalorder %s17, 2
      %p70 = por %p68, %p69
      %p71 = scmp.ne.s32.totalorder %s62, %s63
      %p72 = scmp.eq.s32.totalorder %s17, 0
      %p73 = por %p71, %p72
      %p74 = scmp.ne.s32.totalorder %s62, %s63
      %p75 = scmp.eq.s32.totalorder %s18, 2
      %p76 = por %p74, %p75
      %p78 = scmp.ne.s32.totalorder %s63, %s77
      %p79 = scmp.eq.s32.totalorder %s18, 0
      %p80 = por %p78, %p79
      %s81 = ssub.s32 %s20, %s27
      %p82 = scmp.eq.s32.totalorder %s81, 0
      %s84 = sadd.s32 %s83, 1
      %s85 = scalar_select %p82, %s83, %s84
      %p88 = pneg %p82
      %p89 = scmp.eq.s32.totalorder %s12, 2
      %p90 = por %p88, %p89
      %p91 = scmp.ne.s32.totalorder %s83, %s86
      %p92 = scmp.eq.s32.totalorder %s12, 0
      %p93 = por %p91, %p92
      %p94 = scmp.ne.s32.totalorder %s83, %s86
      %p95 = scmp.eq.s32.totalorder %s17, 2
      %p96 = por %p94, %p95
      %p97 = scmp.ne.s32.totalorder %s86, %s87
      %p98 = scmp.eq.s32.totalorder %s17, 0
      %p99 = por %p97, %p98
      %p100 = scmp.ne.s32.totalorder %s86, %s87
      %p101 = scmp.eq.s32.totalorder %s18, 2
      %p102 = por %p100, %p101
      %p104 = scmp.ne.s32.totalorder %s87, %s103
      %p105 = scmp.eq.s32.totalorder %s18, 0
      %p106 = por %p104, %p105
      %s107 = ssub.s32 %s19, %s31
      %p108 = scmp.eq.s32.totalorder %s107, 0
      %s110 = sadd.s32 %s109, 1
      %s111 = scalar_select %p108, %s109, %s110
      %p114 = pneg %p108
      %p115 = scmp.eq.s32.totalorder %s12, 2
      %p116 = por %p114, %p115
      %p117 = scmp.ne.s32.totalorder %s109, %s112
      %p118 = scmp.eq.s32.totalorder %s12, 0
      %p119 = por %p117, %p118
      %p120 = scmp.ne.s32.totalorder %s109, %s112
      %p121 = scmp.eq.s32.totalorder %s17, 2
      %p122 = por %p120, %p121
      %p123 = scmp.ne.s32.totalorder %s112, %s113
      %p124 = scmp.eq.s32.totalorder %s17, 0
      %p125 = por %p123, %p124
      %p126 = scmp.ne.s32.totalorder %s112, %s113
      %p127 = scmp.eq.s32.totalorder %s18, 2
      %p128 = por %p126, %p127
      %p130 = scmp.ne.s32.totalorder %s113, %s129
      %p131 = scmp.eq.s32.totalorder %s18, 0
      %p132 = por %p130, %p131
      %p133 = scmp.le.s32.totalorder 1, %s12
      %p134 = scmp.lt.s32.totalorder %s12, 4
      %p135 = pnand %p133, %p134
      %p136 = pneg %p135
      // Predicated region
      $region9: #{_crop_resize_call.1} parent=5 // pred_check
        _
      $region10: #{_crop_resize_call.1} parent=5 // pred_check_branch
        %138 = sbr.rel (%p135) target = $region12
      $region11: #{_crop_resize_call.1} parent=5 // pred_region
        %s139 = ssub.s32 %s12, 1
        // Predicated region
        $region13: #{_crop_resize_call.1} parent=11 // pred_check
          %p140 = pneg %p73
        $region14: #{_crop_resize_call.1} parent=11 // pred_check_branch
          %142 = sbr.rel (%p140) target = $region16
        $region15: #{_crop_resize_call.1} parent=11 // pred_region
          _
        $region16: #{_crop_resize_call.1} parent=11 // pred_fallthru
          _
        // Predicated region
        $region17: #{_crop_resize_call.1} parent=11 // pred_check
          %p143 = pneg %p99
        $region18: #{_crop_resize_call.1} parent=11 // pred_check_branch
          %145 = sbr.rel (%p143) target = $region20
        $region19: #{_crop_resize_call.1} parent=11 // pred_region
          %s146 = smul.u32 2, %s22
          %p147 = scmp.lt.s32.totalorder %s146, 1
          %s148 = scalar_select %p147, %s146, 1
          %s149 = smul.addr %s148, 4
          %s150 = scalar_lea.vmem %s2, %s149
          %s151 = smul.u32 2, %s22
        $region20: #{_crop_resize_call.1} parent=11 // pred_fallthru
          _
      $region12: #{_crop_resize_call.1} parent=5 // pred_fallthru
        _
      %p152 = scmp.lt.s32.totalorder %s12, 3
      // Predicated region
      $region21: #{_crop_resize_call.1} parent=5 // pred_check
        %p153 = pneg %p152
      $region22: #{_crop_resize_call.1} parent=5 // pred_check_branch
        %155 = sbr.rel (%p153) target = $region24
      $region23: #{_crop_resize_call.1} parent=5 // pred_region
        // Predicated region
        $region25: #{_crop_resize_call.1} parent=23 // pred_check
          %p156 = pneg %p46
        $region26: #{_crop_resize_call.1} parent=23 // pred_check_branch
          %158 = sbr.rel (%p156) target = $region28
        $region27: #{_crop_resize_call.1} parent=23 // pred_region
          %p159 = scmp.lt.s32.totalorder %s19, 2
          %s160 = scalar_select %p159, %s19, 2
          %p161 = scmp.lt.s32.totalorder %s20, 0
          %s162 = scalar_select %p161, %s20, 0
          %s163 = smul.addr %s160, 2
          %s164 = sadd.s32 %s162, %s163
          %s165 = smul.addr %s164, 4
          %s166 = scalar_lea.vmem %s0, %s165
        $region28: #{_crop_resize_call.1} parent=23 // pred_fallthru
          _
      $region24: #{_crop_resize_call.1} parent=5 // pred_fallthru
        _
      %p167 = scmp.le.s32.totalorder 1, %s12
      %p168 = scmp.lt.s32.totalorder %s12, 4
      %p169 = pnand %p167, %p168
      %p170 = pneg %p169
      // Predicated region
      $region29: #{_crop_resize_call.1} parent=5 // pred_check
        _
      $region30: #{_crop_resize_call.1} parent=5 // pred_check_branch
        %172 = sbr.rel (%p169) target = $region32
      $region31: #{_crop_resize_call.1} parent=5 // pred_region
        %s173 = ssub.s32 %s12, 1
        %p174 = scmp.lt.s32.totalorder %s21, 2
        %s175 = scalar_select %p174, %s21, 2
        %p176 = scmp.lt.s32.totalorder %s22, 0
        %s177 = scalar_select %p176, %s22, 0
        %s178 = smul.addr %s175, 2
        %s179 = sadd.s32 %s177, %s178
        %s180 = smul.addr %s179, 4
        %s181 = scalar_lea.vmem %s0, %s180
        %p182 = pneg %p52
        %p183 = pneg %p49
        %p184 = pneg %p73
        %p185 = pneg %p70
        %s186 = smul.u32 2, %s22
        %p187 = scmp.lt.s32.totalorder %s186, 1
        %s188 = scalar_select %p187, %s186, 1
        %s189 = smul.addr %s188, 4
        %s190 = scalar_lea.vmem %s2, %s189
        %p191 = pneg %p99
        %p192 = pneg %p96
        %p193 = pneg %p125
        %p194 = pneg %p122
        %s195 = sand.u32 %s112, 1
        %s196 = scalar_lea.sflag [#allocation4], %s195
        %s197 = sand.u32 %s112, 1
        %s198 = smul.addr %s197, 8
        %s199 = scalar_lea.vmem [#allocation3], %s198
        %p200 = scmp.lt.s32.totalorder %s21, 2
        %s201 = scalar_select %p200, %s21, 2
        %p202 = scmp.lt.s32.totalorder %s22, 0
        %s203 = scalar_select %p202, %s22, 0
        %s204 = smul.addr %s201, 2
        %s205 = sadd.s32 %s203, %s204
        %s206 = smul.addr %s205, 4
        %s207 = scalar_lea.vmem %s0, %s206
        %s208 = smul.u32 2, %s22
        %p209 = scmp.lt.s32.totalorder %s208, 1
        %s210 = scalar_select %p209, %s208, 1
        %s211 = smul.addr %s210, 4
        %s212 = scalar_lea.vmem %s2, %s211
        %s213 = smul.u32 2, %s22
        %p215 = scmp.eq.s32.totalorder %s22, 0
        // Predicated region
        $region33: #{_crop_resize_call.1} parent=31 // pred_check
          %p216 = pneg %p215
        $region34: #{_crop_resize_call.1} parent=31 // pred_check_branch
          %218 = sbr.rel (%p216) target = $region36
        $region35: #{_crop_resize_call.1} parent=31 // pred_region
          %219 = vst [vmem:[#allocation2] sm:$0xff] 0.0
        $region36: #{_crop_resize_call.1} parent=31 // pred_fallthru
          _
        %v220 = vld [vmem:[%s1] sm:$0xf]
        %v221 = vld [vmem:[%s207] sm:$0xf]
        %v222 = vld [vmem:[%s207 + $0x4] sm:$0xf]
        %v225 = vunpack.c.l.b16 %v221
        %v226 = vunpack.c.l.b16 %v222
        %v227 = vpack.c.b16 %v226, %v225
        %vm229 = vcmask 130048
        %v231 = vsel %vm229, %v220, 0
        %233 = vmatprep.subr.bf16.mxu0 0
        %234 = vmatpush1.bf16.msra.mxu0 %v227
        %235 = vmatprep.subr.bf16.mxu0 0
        %236 = vmatpush1.bf16.msra.mxu0 0
        %237 = vmatprep.subr.bf16.mxu0 0
        %238 = vmatpush1.bf16.msra.mxu0 0
        %239 = vmatprep.subr.bf16.mxu0 0
        %240 = vmatpush1.bf16.msra.mxu0 0
        %241 = vmatprep.subr.bf16.mxu0 0
        %242 = vmatpush1.bf16.msra.mxu0 0
        %243 = vmatprep.subr.bf16.mxu0 0
        %244 = vmatpush1.bf16.msra.mxu0 0
        %245 = vmatprep.subr.bf16.mxu0 0
        %246 = vmatpush1.bf16.msra.mxu0 0
        %247 = vmatprep.subr.bf16.mxu0 0
        %248 = vmatpush1.bf16.msra.mxu0 0
        %249 = vmatprep.subr.bf16.mxu0 0
        %250 = vmatpush1.bf16.msra.mxu0 0
        %251 = vmatprep.subr.bf16.mxu0 0
        %252 = vmatpush1.bf16.msra.mxu0 0
        %253 = vmatprep.subr.bf16.mxu0 0
        %254 = vmatpush1.bf16.msra.mxu0 0
        %255 = vmatprep.subr.bf16.mxu0 0
        %256 = vmatpush1.bf16.msra.mxu0 0
        %257 = vmatprep.subr.bf16.mxu0 0
        %258 = vmatpush1.bf16.msra.mxu0 0
        %259 = vmatprep.subr.bf16.mxu0 0
        %260 = vmatpush1.bf16.msra.mxu0 0
        %261 = vmatprep.subr.bf16.mxu0 0
        %262 = vmatpush1.bf16.msra.mxu0 0
        %263 = vmatprep.subr.bf16.mxu0 0
        %264 = vmatpush1.bf16.msra.mxu0 0
        %265 = vmatprep.mubr.bf16.mxu0 0
        %266 = vmatmul.mubr.bf16.gmra.mrb[0].mxu0 %v231
        %v267 = vpop.f32.mrb[0].mxu0
        %v268 = vadd.f32 0.0, %v267
        %v269 = vpop.f32.mrb[0].mxu0
        %v270 = vpop.f32.mrb[0].mxu0
        %v271 = vpop.f32.mrb[0].mxu0
        %272 = vdwg.mxu0
        %v273 = vld [vmem:[#allocation2] sm:$0xff]
        %v274 = vpack.c.bf16 %v268, %v268
        %v275 = vld [vmem:[%s212] sm:$0xf]
        %v276 = vld [vmem:[%s212 + $0x4] sm:$0xf]
        %v279 = vunpack.c.l.b16 %v275
        %v280 = vunpack.c.l.b16 %v276
        %v281 = vpack.c.b16 %v280, %v279
        %v284 = vsel %vm229, %v274, 0
        %286 = vmatprep.subr.bf16.mxu0 0
        %287 = vmatpush1.bf16.msra.mxu0 %v281
        %288 = vmatprep.subr.bf16.mxu0 0
        %289 = vmatpush1.bf16.msra.mxu0 0
        %290 = vmatprep.subr.bf16.mxu0 0
        %291 = vmatpush1.bf16.msra.mxu0 0
        %292 = vmatprep.subr.bf16.mxu0 0
        %293 = vmatpush1.bf16.msra.mxu0 0
        %294 = vmatprep.subr.bf16.mxu0 0
        %295 = vmatpush1.bf16.msra.mxu0 0
        %296 = vmatprep.subr.bf16.mxu0 0
        %297 = vmatpush1.bf16.msra.mxu0 0
        %298 = vmatprep.subr.bf16.mxu0 0
        %299 = vmatpush1.bf16.msra.mxu0 0
        %300 = vmatprep.subr.bf16.mxu0 0
        %301 = vmatpush1.bf16.msra.mxu0 0
        %302 = vmatprep.subr.bf16.mxu0 0
        %303 = vmatpush1.bf16.msra.mxu0 0
        %304 = vmatprep.subr.bf16.mxu0 0
        %305 = vmatpush1.bf16.msra.mxu0 0
        %306 = vmatprep.subr.bf16.mxu0 0
        %307 = vmatpush1.bf16.msra.mxu0 0
        %308 = vmatprep.subr.bf16.mxu0 0
        %309 = vmatpush1.bf16.msra.mxu0 0
        %310 = vmatprep.subr.bf16.mxu0 0
        %311 = vmatpush1.bf16.msra.mxu0 0
        %312 = vmatprep.subr.bf16.mxu0 0
        %313 = vmatpush1.bf16.msra.mxu0 0
        %314 = vmatprep.subr.bf16.mxu0 0
        %315 = vmatpush1.bf16.msra.mxu0 0
        %316 = vmatprep.subr.bf16.mxu0 0
        %317 = vmatpush1.bf16.msra.mxu0 0
        %318 = vmatprep.mubr.bf16.mxu0 0
        %319 = vmatmul.mubr.bf16.gmra.mrb[0].mxu0 %v284
        %v320 = vpop.f32.mrb[0].mxu0
        %v321 = vadd.f32 0.0, %v320
        %v322 = vpop.f32.mrb[0].mxu0
        %v323 = vpop.f32.mrb[0].mxu0
        %v324 = vpop.f32.mrb[0].mxu0
        %325 = vdwg.mxu0
        %v326 = vadd.f32 %v273, %v321
        %327 = vst [vmem:[#allocation2] sm:$0xff] %v326
        // Predicated region
        $region37: #{_crop_resize_call.1} parent=31 // pred_check
          %p328 = pneg %p215
        $region38: #{_crop_resize_call.1} parent=31 // pred_check_branch
          %330 = sbr.rel (%p328) target = $region40
        $region39: #{_crop_resize_call.1} parent=31 // pred_region
          %v331 = vld [vmem:[#allocation2] sm:$0xff]
          %332 = vst [vmem:[%s199] sm:$0xff] %v331
        $region40: #{_crop_resize_call.1} parent=31 // pred_fallthru
          _
        %s333 = sand.u32 %s112, 1
        %s334 = scalar_lea.sflag [#allocation4], %s333
        %s335 = sand.u32 %s112, 1
        %s336 = smul.addr %s335, 8
        %s337 = scalar_lea.vmem [#allocation3], %s336
        // Predicated region
        $region41: #{_crop_resize_call.1} parent=31 // pred_check
          %p338 = pneg %p122
        $region42: #{_crop_resize_call.1} parent=31 // pred_check_branch
          %340 = sbr.rel (%p338) target = $region44
        $region43: #{_crop_resize_call.1} parent=31 // pred_region
          %s342 = ssub.s32 128, 128
          %343 = vsyncadd %s334, %s342
          %s344 = smul.addr %s21, 128
          %s345 = scalar_lea.hbm %s3, %s344
          %s347 = sshll.u32 %s337, 4
          %s348 = int_to_ptr.vmem [resolvable:$true] %s347
          %350 = dma.vmem_to_hbm [thread:$0]  %s348, 128, %s345, %s334
        $region44: #{_crop_resize_call.1} parent=31 // pred_fallthru
          _
      $region32: #{_crop_resize_call.1} parent=5 // pred_fallthru
        _
      %p351 = scmp.le.s32.totalorder 2, %s12
      // Predicated region
      $region45: #{_crop_resize_call.1} parent=5 // pred_check
        %p352 = pneg %p351
      $region46: #{_crop_resize_call.1} parent=5 // pred_check_branch
        %354 = sbr.rel (%p352) target = $region48
      $region47: #{_crop_resize_call.1} parent=5 // pred_region
        %s355 = ssub.s32 %s12, 2
        // Predicated region
        $region49: #{_crop_resize_call.1} parent=47 // pred_check
          %p356 = pneg %p128
        $region50: #{_crop_resize_call.1} parent=47 // pred_check_branch
          %358 = sbr.rel (%p356) target = $region52
        $region51: #{_crop_resize_call.1} parent=47 // pred_region
          %s359 = sand.u32 %s113, 1
          %s360 = scalar_lea.sflag [#allocation4], %s359
          %s361 = sand.u32 %s113, 1
          %s362 = smul.addr %s361, 8
          %s363 = scalar_lea.vmem [#allocation3], %s362
          %364 = dma.done %s360, 128
        $region52: #{_crop_resize_call.1} parent=47 // pred_fallthru
          _
      $region48: #{_crop_resize_call.1} parent=5 // pred_fallthru
        _
    $region6: #{_crop_resize_call.1} parent=1 // loop_footer
      %s16 = sadd.s32 1, %s12
    $region7: #{_crop_resize_call.1} parent=1 // loop_footer_branch
      %11 = sbr.rel target = $region3
    $region8: #{_crop_resize_call.1} parent=1 // loop_exit
      _
    %365 = vsyncpa [#allocation4], 1
    %s366 = scalar_lea.sflag [#allocation4], 1
    %367 = vsyncpa %s366, 1

</llo_original>
